<compile_context>
chip_gen: v6e
topology: v6e:2x2x1
jax: 0.10.0
libtpu: 0.0.40
codegen_flags: <defaults>
</compile_context>

<pallas_src>
import functools

import jax
import jax.numpy as jnp
from jax.experimental import pallas as pl
from jax.experimental.pallas import tpu as pltpu


def _round_up(x, mult):
    return ((x + mult - 1) // mult) * mult


@functools.lru_cache(maxsize=None)
def _roll_moves_forward() -> bool:
    """One-time probe: True if pltpu.roll(+s) moves lane i -> lane i+s (np.roll).

    The packed-gate layout depends on the rotation direction; resolving it at
    runtime keeps the kernel correct across Mosaic versions.
    """
    def probe(x_ref, o_ref):
        o_ref[...] = pltpu.roll(x_ref[...], 1, axis=1)

    with jax.ensure_compile_time_eval():
        x = jax.lax.broadcasted_iota(jnp.float32, (8, 128), 1)
        y = pl.pallas_call(
            probe, out_shape=jax.ShapeDtypeStruct((8, 128), jnp.float32))(x)
        return bool(jax.device_get(y)[0, 1] == 0.0)


def gru_kernel(x_ref, wih_ref, bias_ref, whh_ref, bhn_ref, mask_ref, v_ref,
               bv_ref, out_ref, xg_scr, h_scr, h_carry,
               *, gate_stride, roll_forward, unroll):
    """One T-chunk of the GRU recurrence + deferred output projection.

    x_ref   : (TC, n)    input rows for this chunk
    wih_ref : (n, W)     input->gates weights, gate blocks at stride S [r|z|n|0]
    bias_ref: (1, W)     b_ih + [b_hr, b_hz, 0]  (r/z hidden biases pre-folded)
    whh_ref : (W, W)     hidden->gates weights, bf16, rows m..W zero
    bhn_ref : (1, W)     b_hn placed on the n block only
    mask_ref: (1, W)     1.0 on home lanes [0, m), else 0
    v_ref   : (W, LP)    output projection weight (rows m..W, cols L..LP zero)
    bv_ref  : (1, LP)    output projection bias (lane-padded)
    out_ref : (TC, LP)   lane-dense output block
    xg_scr  : (TC, W)    input-side gate pre-activations (VMEM scratch)
    h_scr   : (TC, W)    per-step hidden states (VMEM scratch)
    h_carry : (1, W)     hidden state carried across T-chunks (persistent VMEM)
    """
    TC = x_ref.shape[0]
    W = whh_ref.shape[1]
    S = gate_stride                     # r block [0,S), z [S,2S), n [2S,3S)

    def rol(v, k):
        k = k % W
        if k == 0:
            return v
        if not roll_forward:
            k = W - k
        return pltpu.roll(v, k, axis=1)

    # First chunk: zero the carried hidden state (torch default h0 = 0).
    @pl.when(pl.program_id(0) == 0)
    def _():
        h_carry[...] = jnp.zeros_like(h_carry)

    # Bulk MXU pass 1: input-side gate pre-activations for the whole chunk.
    xg_scr[...] = (
        jnp.dot(x_ref[...], wih_ref[...], preferred_element_type=jnp.float32)
        + bias_ref[...]
    )

    # Hoist loop invariants (single vld each). whh arrives pre-cast to bf16 so
    # the per-step recurrent dot is a single MXU pass.
    whh_bf = whh_ref[...]
    bhn = bhn_ref[...]
    mask = mask_ref[...]

    def step(t, h):
        xg = xg_scr[pl.ds(t, 1), :]                                   # (1, W)
        hg = jnp.dot(h.astype(jnp.bfloat16), whh_bf,
                     preferred_element_type=jnp.float32)              # (1, W)
        g = jax.nn.sigmoid(xg + hg)            # r on [0,S), z on [S,2S)
        r_n = rol(g, 2 * S)                    # r aligned onto the n block
        n_full = jnp.tanh(xg + r_n * (hg + bhn))   # valid on [2S, 2S+m)
        n0 = rol(n_full, W - 2 * S) * mask     # n -> home lanes [0,m), rest 0
        z0 = rol(g, W - S)                     # z -> home lanes [0,m)
        h_new = n0 + z0 * (h - n0)             # == (1-z)*n + z*h, one op less
        # TODO(synk): batch these (1, W) stores into (8, W) sublane tiles.
        h_scr[pl.ds(t, 1), :] = h_new          # off the h-dependency chain
        return h_new

    h_last = jax.lax.fori_loop(0, TC, step, h_carry[...], unroll=unroll)
    h_carry[...] = h_last                      # carry h into the next chunk

    # Bulk MXU pass 2: deferred output projection, one lane-dense store.
    # TODO(synk): on v7x, split the two bulk matmuls onto the second TensorCore
    #             (core_map / parallel axis); the recurrence stays serial here.
    out_ref[...] = (
        jnp.dot(h_scr[...], v_ref[...], preferred_element_type=jnp.float32)
        + bv_ref[...]
    )


def gru_interface_forward(X, params, *, t_chunk=256, unroll=8):
    """X: (T, n) float32.  Returns (T, L) float32 (same math as GRUInterface)."""
    wih, whh, bih, bhh, V, bV = (
        params["wih"], params["whh"], params["bih"],
        params["bhh"], params["V"], params["bV"],
    )
    T, n = X.shape
    m = whh.shape[0]
    L = V.shape[1]

    # Gate layout: pack all three gates into one 128-lane block when they fit
    # (3m <= 128); otherwise each gate gets its own lane-aligned block.
    S = m if 3 * m <= 128 else _round_up(m, 128)
    W = _round_up(3 * S, 128)
    LP = _round_up(L, 128)                       # lane-dense output width
    TC = min(_round_up(T, 8), _round_up(t_chunk, 8))   # rows per grid step
    T_pad = _round_up(T, TC)
    n_chunks = T_pad // TC
    # NOTE: per-chunk VMEM (~TC * (n + 2W + 2*LP) * 4B + weights) stays well
    # under even v5e's 16 MiB scoped default at TC=256, so no vmem_limit bump.

    def pad_gates(w):
        # (rows, 3m) -> (rows, W): gate blocks at stride S, layout [r | z | n | 0].
        r_, z_, n_ = jnp.split(w, 3, axis=-1)
        out = jnp.zeros(w.shape[:-1] + (W,), jnp.float32)
        return (out.at[..., 0:m].set(r_)
                   .at[..., S:S + m].set(z_)
                   .at[..., 2 * S:2 * S + m].set(n_))

    wih_p = pad_gates(wih)                                         # (n, W)
    whh_p = jnp.zeros((W, W), jnp.float32).at[:m].set(pad_gates(whh))
    whh_bf = whh_p.astype(jnp.bfloat16)        # single-pass MXU per step
    bih_p = pad_gates(bih)
    bhh_p = pad_gates(bhh)
    bias_p = bih_p + bhh_p.at[:, 2 * S:].set(0.0)   # fold b_hr, b_hz only
    bhn_p = bhh_p.at[:, :2 * S].set(0.0)            # b_hn stays under r_t*(.)
    mask = (jax.lax.broadcasted_iota(jnp.int32, (1, W), 1) < m
            ).astype(jnp.float32)
    v_p = jnp.zeros((W, LP), jnp.float32).at[:m, :L].set(V)
    bv_p = jnp.zeros((1, LP), jnp.float32).at[:, :L].set(bV)
    x_p = jnp.pad(X.astype(jnp.float32), ((0, T_pad - T), (0, 0)))

    kernel = functools.partial(
        gru_kernel,
        gate_stride=S,
        roll_forward=_roll_moves_forward(),
        unroll=min(unroll, TC),
    )

    out = pl.pallas_call(
        kernel,
        out_shape=jax.ShapeDtypeStruct((T_pad, LP), jnp.float32),
        grid=(n_chunks,),
        in_specs=[
            pl.BlockSpec((TC, n), lambda i: (i, 0)),     # X, streamed by chunk
            pl.BlockSpec((n, W), lambda i: (0, 0)),      # wih (VMEM resident)
            pl.BlockSpec((1, W), lambda i: (0, 0)),      # folded bias
            pl.BlockSpec((W, W), lambda i: (0, 0)),      # whh (bf16, resident)
            pl.BlockSpec((1, W), lambda i: (0, 0)),      # b_hn (n block only)
            pl.BlockSpec((1, W), lambda i: (0, 0)),      # home-lane mask
            pl.BlockSpec((W, LP), lambda i: (0, 0)),     # V
            pl.BlockSpec((1, LP), lambda i: (0, 0)),     # bV
        ],
        out_specs=pl.BlockSpec((TC, LP), lambda i: (i, 0)),
        scratch_shapes=[
            pltpu.VMEM((TC, W), jnp.float32),    # xg: input-side pre-acts
            pltpu.VMEM((TC, W), jnp.float32),    # per-step hidden states
            pltpu.VMEM((1, W), jnp.float32),     # h carried across chunks
        ],
        compiler_params=pltpu.CompilerParams(
            dimension_semantics=("arbitrary",)),  # serial recurrence over T
    )(x_p, wih_p, bias_p, whh_bf, bhn_p, mask, v_p, bv_p)

    return out[:T, :L]


def make_params(key, m, n, L):
    """Deterministic init mirroring torch shapes (gate order [r, z, n])."""
    ks = jax.random.split(key, 6)
    s_gru = 1.0 / jnp.sqrt(m)
    s_lin = 1.0 / jnp.sqrt(m)
    # torch stores weight_ih_l0 as (3m, n); we keep the transposed (n, 3m)
    # layout so the kernel does x @ W directly.
    wih = jax.random.uniform(ks[0], (n, 3 * m), jnp.float32, -s_gru, s_gru)
    whh = jax.random.uniform(ks[1], (m, 3 * m), jnp.float32, -s_gru, s_gru)
    bih = jax.random.uniform(ks[2], (1, 3 * m), jnp.float32, -s_gru, s_gru)
    bhh = jax.random.uniform(ks[3], (1, 3 * m), jnp.float32, -s_gru, s_gru)
    V = jax.random.uniform(ks[4], (m, L), jnp.float32, -s_lin, s_lin)
    bV = jax.random.uniform(ks[5], (1, L), jnp.float32, -s_lin, s_lin)
    return dict(wih=wih, whh=whh, bih=bih, bhh=bhh, V=V, bV=bV)


def reference_forward(X, p):
    """Pure-JAX f32 reference of the same math (precision pinned to HIGHEST)."""
    m = p["whh"].shape[0]
    hp = jax.lax.Precision.HIGHEST
    xg = jnp.dot(X, p["wih"], precision=hp) + p["bih"]

    def step(h, xg_t):
        hg = jnp.dot(h, p["whh"], precision=hp) + p["bhh"]
        r = jax.nn.sigmoid(xg_t[None, :m] + hg[:, :m])
        z = jax.nn.sigmoid(xg_t[None, m:2 * m] + hg[:, m:2 * m])
        n_ = jnp.tanh(xg_t[None, 2 * m:] + r * hg[:, 2 * m:])
        h_new = (1.0 - z) * n_ + z * h
        return h_new, h_new[0]

    h0 = jnp.zeros((1, m), jnp.float32)
    _, H = jax.lax.scan(step, h0, xg)
    return jnp.dot(H, p["V"], precision=hp) + p["bV"]


def reference_forward_bf16_dot(X, p):
    """Same math, but the recurrent dot mimics the kernel's bf16 MXU pass."""
    m = p["whh"].shape[0]
    hp = jax.lax.Precision.HIGHEST
    whh_bf = p["whh"].astype(jnp.bfloat16)
    xg = jnp.dot(X, p["wih"], precision=hp) + p["bih"]

    def step(h, xg_t):
        hg = jnp.dot(h.astype(jnp.bfloat16), whh_bf,
                     preferred_element_type=jnp.float32) + p["bhh"]
        r = jax.nn.sigmoid(xg_t[None, :m] + hg[:, :m])
        z = jax.nn.sigmoid(xg_t[None, m:2 * m] + hg[:, m:2 * m])
        n_ = jnp.tanh(xg_t[None, 2 * m:] + r * hg[:, 2 * m:])
        h_new = (1.0 - z) * n_ + z * h
        return h_new, h_new[0]

    h0 = jnp.zeros((1, m), jnp.float32)
    _, H = jax.lax.scan(step, h0, xg)
    return jnp.dot(H, p["V"], precision=hp) + p["bV"]


if __name__ == "__main__":
    # Small shapes consistent with the module: seq T=8, input n=4,
    # hidden m=32, output L=8.
    T, n, m, L = 8, 4, 32, 8
    key = jax.random.PRNGKey(0)
    kx, kp = jax.random.split(key)
    X = jax.random.normal(kx, (T, n), jnp.float32)
    params = make_params(kp, m, n, L)

    _roll_moves_forward()  # resolve the roll-direction probe eagerly (cached)

    fwd = jax.jit(gru_interface_forward)
    out = jax.block_until_ready(fwd(X, params))

    ref_f32 = reference_forward(X, params)
    ref_bf16 = reference_forward_bf16_dot(X, params)
    assert out.shape == (T, L)
    # bf16 recurrent matmul in the kernel => loosened tolerance vs the pure-f32
    # reference; the bf16-dot reference is compared more tightly.
    assert jnp.allclose(out, ref_f32, atol=3e-2, rtol=3e-2), \
        "mismatch vs f32 reference"
    assert jnp.allclose(out, ref_bf16, atol=1e-2, rtol=1e-2), \
        "mismatch vs bf16-dot reference"

    print("KERNEL_OK")
</pallas_src>

<mosaic_0001>
module attributes {stable_mosaic.version = 11 : i64} {
  func.func @probe(%arg0: memref<8x128xf32, #tpu.memory_space<vmem>>, %arg1: memref<8x128xf32, #tpu.memory_space<vmem>>) attributes {dimension_semantics = [], scalar_prefetch = 0 : i64, scratch_operands = 0 : i64, tpu.core_type = #tpu.core_type<tc>} {
    %c0 = arith.constant 0 : index
    %c0_0 = arith.constant 0 : index
    %0 = vector.load %arg0[%c0, %c0_0] : memref<8x128xf32, #tpu.memory_space<vmem>>, vector<8x128xf32>
    %c1_i32 = arith.constant 1 : i32
    %1 = tpu.dynamic_rotate %0 by %c1_i32 dim 1 : vector<8x128xf32>, i32 -> vector<8x128xf32>
    %c0_1 = arith.constant 0 : index
    %c0_2 = arith.constant 0 : index
    %2 = vector.load %arg1[%c0_1, %c0_2] : memref<8x128xf32, #tpu.memory_space<vmem>>, vector<8x128xf32>
    tpu.vector_store %arg1[%c0_1, %c0_2], %1 {strides = array<i32>} : memref<8x128xf32, #tpu.memory_space<vmem>>, vector<8x128xf32>,
    return
  }
}

</mosaic_0001>

<llo_original>
// kernel: tpu_custom_call.1
$region0: #{tpu_custom_call.1}
  #allocation0 [shape = 'u32[]', space=smem, size = 0x4, offset = 0x4, fixed_abs, tag = 'smem constant byte address 0x4 - core index']
  #allocation1 [shape = 'u32[144,128]{1,0:T(1,128)}', space=vmem, size = 0x12000, scoped, tag = 'internal scratch']
  %s0 = inlined_call_operand.hbm [shape: f32[8,128], index: 0, kind: input, shape index: {}]
  %s1 = inlined_call_operand.hbm [shape: f32[8,128], index: 1, kind: output, shape index: {}]
  %s2 = sld [smem:[#allocation0]]
  $region18: #{tpu_custom_call.1} parent=0
    _
  %s4 = ssub.s32 1, %s2
  %s5 = scalar_select 0, %s4, %s2
  $region1: #{tpu_custom_call.1} parent=0
    #allocation2 [shape = 'u8[4096]{0}', space=vmem, size = 0x1000, scoped, tag = 'input window, operand 0, single buffered']
    #allocation3 [shape = 's32[1]{0}', space=sflag, size = 0x4, scoped, tag = 'scoped memory for tpu_custom_call.1']
    #allocation4 [shape = 's32[1]{0}', space=sflag, size = 0x4, scoped, tag = 'scoped memory for tpu_custom_call.1']
    #allocation5 [shape = 'u8[4096]{0}', space=vmem, size = 0x1000, scoped, tag = 'output window, operand 0, single buffered']
    %6 = vsyncpa [#allocation3], 0
    %7 = vsyncpa [#allocation4], 0
    // Predicated region
    $region2: #{tpu_custom_call.1} parent=1 // pred_check
      _
    $region3: #{tpu_custom_call.1} parent=1 // pred_check_branch
      %9 = sbr.rel (0) target = $region5
    $region4: #{tpu_custom_call.1} parent=1 // pred_region
      %s11 = ssub.s32 128, 128
      %12 = vsyncadd [#allocation3], %s11
      %s14 = sshll.u32 [#allocation2], 4
      %s15 = int_to_ptr.vmem [resolvable:$true] %s14
      %17 = dma.hbm_to_vmem [thread:$0]  %s0, 128, %s15, [#allocation3]
    $region5: #{tpu_custom_call.1} parent=1 // pred_fallthru
      _
    // Predicated region
    $region6: #{tpu_custom_call.1} parent=1 // pred_check
      _
    $region7: #{tpu_custom_call.1} parent=1 // pred_check_branch
      %19 = sbr.rel (0) target = $region9
    $region8: #{tpu_custom_call.1} parent=1 // pred_region
      %20 = dma.done [#allocation3], 128
    $region9: #{tpu_custom_call.1} parent=1 // pred_fallthru
      _
    %v21 = vld [vmem:[#allocation2] sm:$0xff]
    %22 = vrot.lane.b32.xlu0 %v21, 1
    %v23 = vpop.permute.xlu0 %22
    %24 = vst [vmem:[#allocation5] sm:$0xff] %v23
    // Predicated region
    $region10: #{tpu_custom_call.1} parent=1 // pred_check
      _
    $region11: #{tpu_custom_call.1} parent=1 // pred_check_branch
      %26 = sbr.rel (0) target = $region13
    $region12: #{tpu_custom_call.1} parent=1 // pred_region
      %s28 = ssub.s32 128, 128
      %29 = vsyncadd [#allocation4], %s28
      %s31 = sshll.u32 [#allocation5], 4
      %s32 = int_to_ptr.vmem [resolvable:$true] %s31
      %34 = dma.vmem_to_hbm [thread:$0]  %s32, 128, %s1, [#allocation4]
    $region13: #{tpu_custom_call.1} parent=1 // pred_fallthru
      _
    // Predicated region
    $region14: #{tpu_custom_call.1} parent=1 // pred_check
      _
    $region15: #{tpu_custom_call.1} parent=1 // pred_check_branch
      %36 = sbr.rel (0) target = $region17
    $region16: #{tpu_custom_call.1} parent=1 // pred_region
      %37 = dma.done [#allocation4], 128
    $region17: #{tpu_custom_call.1} parent=1 // pred_fallthru
      _
    %38 = vsyncpa [#allocation3], 1
    %39 = vsyncpa [#allocation4], 1

</llo_original>
